<compile_context>
chip_gen: v6e
topology: v6e:2x2x1
jax: 0.10.0
libtpu: 0.0.40
codegen_flags: <defaults>
</compile_context>

<pallas_src>
import functools

import jax
import jax.numpy as jnp
from jax.experimental import pallas as pl
from jax.experimental.pallas import tpu as pltpu


def _round_up(x, m):
    return ((x + m - 1) // m) * m


def _block_diag(ws):
    """Stacked per-model weights (M, a, b) -> block-diagonal (M*a, M*b)."""
    m, a, b = ws.shape
    eye = jnp.eye(m, dtype=ws.dtype)
    return jnp.einsum("mn,mab->manb", eye, ws).reshape(m * a, m * b)


# --------------------------------------------------------------------------
# One-time parameter fusion (hoisted out of the forward pass).
# --------------------------------------------------------------------------
def prepare_params(params, matmul_dtype=jnp.bfloat16):
    """Build fused lane-dense weights + averaging matrix.  Call ONCE, reuse."""
    w1, b1, w2, b2, w3, b3 = (params[k] for k in
                              ("w1", "b1", "w2", "b2", "w3", "b3"))
    n_models, d_in, hidden = w1.shape
    four_out = w3.shape[-1]
    mh = n_models * hidden
    mo = n_models * four_out
    out_pad = _round_up(mo, 128)             # lane-dense stacked head width
    head_pad = _round_up(four_out, 128)      # lane-dense averaged output width

    w1_cat = jnp.swapaxes(w1, 0, 1).reshape(d_in, mh).astype(matmul_dtype)
    b1_cat = b1.reshape(1, mh).astype(jnp.float32)
    w2_bd = _block_diag(w2).astype(matmul_dtype)                         # (mh, mh)
    b2_cat = b2.reshape(1, mh).astype(jnp.float32)
    w3_bd = jnp.pad(_block_diag(w3), ((0, 0), (0, out_pad - mo)))
    w3_bd = w3_bd.astype(matmul_dtype)                                   # (mh, out_pad)
    b3_cat = jnp.pad(b3.reshape(1, mo), ((0, 0), (0, out_pad - mo)))
    b3_cat = b3_cat.astype(jnp.float32)

    # Averaging matrix A with A[m*four_out + c, c] = 1/M (zero rows/cols in the
    # padding), so val @ A is exactly the ensemble mean of the transformed head.
    lanes = jnp.arange(out_pad)
    cols = jnp.arange(head_pad)
    hit = (lanes[:, None] < mo) & ((lanes[:, None] % four_out) == cols[None, :])
    avg = jnp.where(hit, 1.0 / n_models, 0.0).astype(jnp.float32)        # (out_pad, head_pad)

    return dict(w1=w1_cat, b1=b1_cat, w2=w2_bd, b2=b2_cat,
                w3=w3_bd, b3=b3_cat, avg=avg)


# --------------------------------------------------------------------------
# Kernel: one batch tile -> fused 3-layer ensemble MLP + evidential head +
# in-kernel ensemble mean (single lane-dense store).
# --------------------------------------------------------------------------
def _ensemble_kernel(x_ref, w1_ref, b1_ref, w2_ref, b2_ref, w3_ref, b3_ref,
                     avg_ref, out_ref, *, four_out, compute_dtype):
    x = x_ref[...].astype(compute_dtype)                      # f32 -> bf16 on VPU

    # layer 1: (tb, D_in) @ (D_in, M*H) -> (tb, M*H); f32 accumulation
    h1 = jnp.dot(x, w1_ref[...], preferred_element_type=jnp.float32)
    h1 = jnp.maximum(h1 + b1_ref[...], 0.0)

    # layer 2: block-diagonal fused W2 -> (tb, M*H)
    h2 = jnp.dot(h1.astype(compute_dtype), w2_ref[...],
                 preferred_element_type=jnp.float32)
    h2 = jnp.maximum(h2 + b2_ref[...], 0.0)

    # evidential head: block-diagonal fused W3 -> (tb, out_pad)
    raw = jnp.dot(h2.astype(compute_dtype), w3_ref[...],
                  preferred_element_type=jnp.float32) + b3_ref[...]

    # Per-model channel order [mu, v, alpha, beta]; apply softplus / +1 with a
    # lane-index select (no 1-lane slices, no concat).  Padded lanes are
    # exactly zero (zero-padded W3/b3) and are killed by the averaging matrix.
    out_dim = four_out // 4
    ch = jax.lax.broadcasted_iota(jnp.int32, raw.shape, 1) % four_out
    softplus = jnp.maximum(raw, 0.0) + jnp.log1p(jnp.exp(-jnp.abs(raw)))
    is_mu = ch < out_dim
    is_alpha = (ch >= 2 * out_dim) & (ch < 3 * out_dim)
    val = jnp.where(is_mu, raw, softplus)
    val = val + jnp.where(is_alpha, 1.0, 0.0)

    # Ensemble mean folded into the kernel: one tiny lane-dense f32 matmul.
    out_ref[...] = jnp.dot(val, avg_ref[...],
                           preferred_element_type=jnp.float32)


# --------------------------------------------------------------------------
# Forward wrapper.
# --------------------------------------------------------------------------
def ensemble_forward(x, fused, *, four_out, batch_tile=1024,
                     single_buffer_weights=False):
    """x: (B, D_in) float32.  fused: output of prepare_params().

    Returns (mu, v, alpha, beta), each (B, out_dim) f32, averaged over models.
    """
    w1, b1, w2, b2, w3, b3, avg = (fused[k] for k in
                                   ("w1", "b1", "w2", "b2", "w3", "b3", "avg"))
    d_in, mh = w1.shape
    out_pad, head_pad = avg.shape
    out_dim = four_out // 4
    compute_dtype = w1.dtype                 # matmul dtype carried by the weights
    batch = x.shape[0]

    # ---- batch tiling (parallel axis; partial last block handled by Pallas) --
    b_pad8 = _round_up(batch, 8)
    x_p = x if b_pad8 == batch else jnp.pad(x, ((0, b_pad8 - batch), (0, 0)))
    # NOTE: no wrapper-side cast of x -- the kernel casts on the VPU.

    tb = min(batch_tile, b_pad8)
    # v7x megacore: for non-tiny batches guarantee >= 2 grid steps so the
    # "parallel" axis shards across both TensorCores.
    if b_pad8 > 128 and b_pad8 <= tb:
        tb = _round_up(pl.cdiv(b_pad8, 2), 8)
    grid = (pl.cdiv(b_pad8, tb),)

    # ---- explicit VMEM budget (generous; clamped) ---------------------------
    wbytes = jnp.dtype(compute_dtype).itemsize
    weight_bytes = ((d_in * mh + mh * mh + mh * out_pad) * wbytes
                    + (2 * mh + 2 * out_pad) * 4 + out_pad * head_pad * 4)
    io_bytes = tb * d_in * 4 + tb * head_pad * 4
    act_bytes = tb * (2 * mh + 2 * out_pad) * 4 + tb * (mh + out_pad) * wbytes
    vmem_limit = int(min(max(2 * (weight_bytes + io_bytes) + act_bytes + (4 << 20),
                             16 << 20), 100 << 20))

    # Grid-invariant weight specs.  On v7x (64 MiB VMEM) set
    # single_buffer_weights=True to halve their footprint (pl.Buffered(1)).
    def w_spec(shape):
        if single_buffer_weights:
            return pl.BlockSpec(shape, lambda i: (0, 0),
                                pipeline_mode=pl.Buffered(1))
        return pl.BlockSpec(shape, lambda i: (0, 0))

    kernel = functools.partial(_ensemble_kernel, four_out=four_out,
                               compute_dtype=compute_dtype)

    out = pl.pallas_call(
        kernel,
        out_shape=jax.ShapeDtypeStruct((b_pad8, head_pad), jnp.float32),
        grid=grid,
        in_specs=[
            pl.BlockSpec((tb, d_in), lambda i: (i, 0)),        # x tile (f32)
            w_spec((d_in, mh)),                                # W1_cat (resident)
            w_spec((1, mh)),                                   # b1
            w_spec((mh, mh)),                                  # W2 block-diag
            w_spec((1, mh)),                                   # b2
            w_spec((mh, out_pad)),                             # W3 block-diag (padded)
            w_spec((1, out_pad)),                              # b3 (padded)
            w_spec((out_pad, head_pad)),                       # averaging matrix
        ],
        out_specs=pl.BlockSpec((tb, head_pad), lambda i: (i, 0)),
        compiler_params=pltpu.CompilerParams(
            dimension_semantics=("parallel",),                 # megacore on v7x
            vmem_limit_bytes=vmem_limit),
    )(x_p, w1, b1, w2, b2, w3, b3, avg)

    # ---- only channel slicing left in the wrapper ---------------------------
    mean = out[:batch, :four_out]
    mu = mean[:, 0 * out_dim:1 * out_dim]
    v = mean[:, 1 * out_dim:2 * out_dim]
    alpha = mean[:, 2 * out_dim:3 * out_dim]
    beta = mean[:, 3 * out_dim:4 * out_dim]
    return mu, v, alpha, beta


# --------------------------------------------------------------------------
# Synthetic init + pure-JAX reference.
# --------------------------------------------------------------------------
def init_params(key, n_models, d_in, hidden, out_dim):
    """Deterministic synthetic init (Kaiming-style scaling), stacked per model."""
    keys = jax.random.split(key, 6)
    s1 = (2.0 / d_in) ** 0.5
    s2 = (2.0 / hidden) ** 0.5
    s3 = (1.0 / hidden) ** 0.5
    return {
        "w1": s1 * jax.random.normal(keys[0], (n_models, d_in, hidden), jnp.float32),
        "b1": 0.01 * jax.random.normal(keys[1], (n_models, 1, hidden), jnp.float32),
        "w2": s2 * jax.random.normal(keys[2], (n_models, hidden, hidden), jnp.float32),
        "b2": 0.01 * jax.random.normal(keys[3], (n_models, 1, hidden), jnp.float32),
        "w3": s3 * jax.random.normal(keys[4], (n_models, hidden, 4 * out_dim), jnp.float32),
        "b3": 0.01 * jax.random.normal(keys[5], (n_models, 1, 4 * out_dim), jnp.float32),
    }


def _reference_forward(x, params):
    """Pure-JAX reference for the ensemble of evidential MLPs."""
    def one_model(w1, b1, w2, b2, w3, b3):
        h1 = jnp.maximum(x @ w1 + b1, 0.0)
        h2 = jnp.maximum(h1 @ w2 + b2, 0.0)
        raw = h2 @ w3 + b3
        od = raw.shape[-1] // 4
        mu = raw[:, 0:od]
        v = jax.nn.softplus(raw[:, od:2 * od])
        alpha = jax.nn.softplus(raw[:, 2 * od:3 * od]) + 1.0
        beta = jax.nn.softplus(raw[:, 3 * od:4 * od])
        return mu, v, alpha, beta

    outs = jax.vmap(one_model)(params["w1"], params["b1"], params["w2"],
                               params["b2"], params["w3"], params["b3"])
    return tuple(o.mean(axis=0) for o in outs)


if __name__ == "__main__":
    # small shapes consistent with the module's (batch, input_dim) interface
    batch, d_in, hidden, out_dim, n_models = 8, 16, 32, 1, 4

    key = jax.random.PRNGKey(0)
    kx, kp = jax.random.split(key)
    x = jax.random.normal(kx, (batch, d_in), jnp.float32)
    params = init_params(kp, n_models, d_in, hidden, out_dim)

    ref = _reference_forward(x, params)

    fwd = jax.jit(ensemble_forward,
                  static_argnames=("four_out", "batch_tile",
                                   "single_buffer_weights"))

    # f32 matmul path: tight semantic check against the reference
    fused_f32 = prepare_params(params, matmul_dtype=jnp.float32)   # one-time
    got_f32 = fwd(x, fused_f32, four_out=4 * out_dim)
    jax.block_until_ready(got_f32)
    for got, want in zip(got_f32, ref):
        assert got.shape == (batch, out_dim)
        assert jnp.allclose(got, want, atol=1e-4, rtol=1e-4)

    # bf16 matmul path (default fast path on v6e/v7x): looser tolerance
    fused_bf16 = prepare_params(params, matmul_dtype=jnp.bfloat16)  # one-time
    got_bf16 = fwd(x, fused_bf16, four_out=4 * out_dim)
    jax.block_until_ready(got_bf16)
    for got, want in zip(got_bf16, ref):
        assert got.shape == (batch, out_dim)
        assert jnp.allclose(got, want, atol=5e-2, rtol=5e-2)

    # TODO(synk): get_individual_outputs (per-model outputs) would reuse the same
    # kernel with the averaging matmul skipped; not wired up here.
    print("KERNEL_OK")
</pallas_src>

<mosaic_0001>
module attributes {stable_mosaic.version = 11 : i64} {
  func.func @_ensemble_kernel(%arg0: i32, %arg1: memref<8x16xf32, #tpu.memory_space<vmem>>, %arg2: memref<16x128xf32, #tpu.memory_space<vmem>>, %arg3: memref<1x128xf32, #tpu.memory_space<vmem>>, %arg4: memref<128x128xf32, #tpu.memory_space<vmem>>, %arg5: memref<1x128xf32, #tpu.memory_space<vmem>>, %arg6: memref<128x128xf32, #tpu.memory_space<vmem>>, %arg7: memref<1x128xf32, #tpu.memory_space<vmem>>, %arg8: memref<128x128xf32, #tpu.memory_space<vmem>>, %arg9: memref<8x128xf32, #tpu.memory_space<vmem>>) attributes {dimension_semantics = [#tpu.dimension_semantics<parallel>], iteration_bounds = array<i64: 1>, scalar_prefetch = 0 : i64, scratch_operands = 0 : i64, tpu.core_type = #tpu.core_type<tc>, window_params = [{transform_indices = @transform_0, window_bounds = array<i64: 8, 16>}, {pipeline_mode = #tpu.pipeline_mode<synchronous>, transform_indices = @transform_1, window_bounds = array<i64: 16, 128>}, {pipeline_mode = #tpu.pipeline_mode<synchronous>, transform_indices = @transform_2, window_bounds = array<i64: 1, 128>}, {pipeline_mode = #tpu.pipeline_mode<synchronous>, transform_indices = @transform_3, window_bounds = array<i64: 128, 128>}, {pipeline_mode = #tpu.pipeline_mode<synchronous>, transform_indices = @transform_4, window_bounds = array<i64: 1, 128>}, {pipeline_mode = #tpu.pipeline_mode<synchronous>, transform_indices = @transform_5, window_bounds = array<i64: 128, 128>}, {pipeline_mode = #tpu.pipeline_mode<synchronous>, transform_indices = @transform_6, window_bounds = array<i64: 1, 128>}, {pipeline_mode = #tpu.pipeline_mode<synchronous>, transform_indices = @transform_7, window_bounds = array<i64: 128, 128>}, {transform_indices = @transform_8, window_bounds = array<i64: 8, 128>}]} {
    %c0 = arith.constant 0 : index
    %c0_0 = arith.constant 0 : index
    %0 = vector.load %arg1[%c0, %c0_0] : memref<8x16xf32, #tpu.memory_space<vmem>>, vector<8x16xf32>
    %c0_1 = arith.constant 0 : index
    %c0_2 = arith.constant 0 : index
    %1 = vector.load %arg2[%c0_1, %c0_2] : memref<16x128xf32, #tpu.memory_space<vmem>>, vector<16x128xf32>
    %cst = arith.constant dense<0.000000e+00> : vector<8x128xf32>
    %2 = tpu.matmul %0, %1, %cst {dimension_numbers = #tpu.dot_dimension_numbers<[1], [0], [0], [1], [0, 0, 1, 1], [], []>} : vector<8x16xf32>, vector<16x128xf32>, vector<8x128xf32> -> vector<8x128xf32>
    %c0_3 = arith.constant 0 : index
    %c0_4 = arith.constant 0 : index
    %3 = vector.load %arg3[%c0_3, %c0_4] : memref<1x128xf32, #tpu.memory_space<vmem>>, vector<1x128xf32>
    %4 = vector.broadcast %3 : vector<1x128xf32> to vector<8x128xf32>
    %5 = arith.addf %2, %4 : vector<8x128xf32>
    %cst_5 = arith.constant 0.000000e+00 : f32
    %6 = vector.broadcast %cst_5 : f32 to vector<8x128xf32>
    %7 = arith.maximumf %5, %6 : vector<8x128xf32>
    %c0_6 = arith.constant 0 : index
    %c0_7 = arith.constant 0 : index
    %8 = vector.load %arg4[%c0_6, %c0_7] : memref<128x128xf32, #tpu.memory_space<vmem>>, vector<128x128xf32>
    %cst_8 = arith.constant dense<0.000000e+00> : vector<8x128xf32>
    %9 = tpu.matmul %7, %8, %cst_8 {dimension_numbers = #tpu.dot_dimension_numbers<[1], [0], [0], [1], [0, 0, 1, 1], [], []>} : vector<8x128xf32>, vector<128x128xf32>, vector<8x128xf32> -> vector<8x128xf32>
    %c0_9 = arith.constant 0 : index
    %c0_10 = arith.constant 0 : index
    %10 = vector.load %arg5[%c0_9, %c0_10] : memref<1x128xf32, #tpu.memory_space<vmem>>, vector<1x128xf32>
    %11 = vector.broadcast %10 : vector<1x128xf32> to vector<8x128xf32>
    %12 = arith.addf %9, %11 : vector<8x128xf32>
    %cst_11 = arith.constant 0.000000e+00 : f32
    %13 = vector.broadcast %cst_11 : f32 to vector<8x128xf32>
    %14 = arith.maximumf %12, %13 : vector<8x128xf32>
    %c0_12 = arith.constant 0 : index
    %c0_13 = arith.constant 0 : index
    %15 = vector.load %arg6[%c0_12, %c0_13] : memref<128x128xf32, #tpu.memory_space<vmem>>, vector<128x128xf32>
    %cst_14 = arith.constant dense<0.000000e+00> : vector<8x128xf32>
    %16 = tpu.matmul %14, %15, %cst_14 {dimension_numbers = #tpu.dot_dimension_numbers<[1], [0], [0], [1], [0, 0, 1, 1], [], []>} : vector<8x128xf32>, vector<128x128xf32>, vector<8x128xf32> -> vector<8x128xf32>
    %c0_15 = arith.constant 0 : index
    %c0_16 = arith.constant 0 : index
    %17 = vector.load %arg7[%c0_15, %c0_16] : memref<1x128xf32, #tpu.memory_space<vmem>>, vector<1x128xf32>
    %18 = vector.broadcast %17 : vector<1x128xf32> to vector<8x128xf32>
    %19 = arith.addf %16, %18 : vector<8x128xf32>
    %20 = tpu.iota {dimensions = array<i32: 1>} : vector<8x128xi32>
    %c4_i32 = arith.constant 4 : i32
    %c0_i32 = arith.constant 0 : i32
    %21 = arith.cmpi eq, %c4_i32, %c0_i32 : i32
    %c1_i32 = arith.constant 1 : i32
    %22 = arith.select %21, %c1_i32, %c4_i32 : i32
    %23 = vector.broadcast %22 : i32 to vector<8x128xi32>
    %24 = arith.remsi %20, %23 : vector<8x128xi32>
    %c0_i32_17 = arith.constant 0 : i32
    %25 = vector.broadcast %c0_i32_17 : i32 to vector<8x128xi32>
    %26 = arith.cmpi ne, %24, %25 : vector<8x128xi32>
    %c0_i32_18 = arith.constant 0 : i32
    %27 = vector.broadcast %c0_i32_18 : i32 to vector<8x128xi32>
    %28 = arith.cmpi slt, %24, %27 : vector<8x128xi32>
    %c0_i32_19 = arith.constant 0 : i32
    %29 = arith.cmpi slt, %22, %c0_i32_19 : i32
    %30 = vector.broadcast %29 : i1 to vector<8x128xi1>
    %31 = vector.broadcast %30 : vector<8x128xi1> to vector<8x128xi1>
    %32 = arith.xori %28, %31 : vector<8x128xi1>
    %33 = arith.andi %32, %26 : vector<8x128xi1>
    %34 = vector.broadcast %22 : i32 to vector<8x128xi32>
    %35 = arith.addi %24, %34 : vector<8x128xi32>
    %36 = arith.select %33, %35, %24 : vector<8x128xi1>, vector<8x128xi32>
    %cst_20 = arith.constant 0.000000e+00 : f32
    %37 = vector.broadcast %cst_20 : f32 to vector<8x128xf32>
    %38 = arith.maximumf %19, %37 : vector<8x128xf32>
    %39 = math.absf %19 : vector<8x128xf32>
    %cst_21 = arith.constant 0.000000e+00 : f32
    %40 = vector.broadcast %cst_21 : f32 to vector<8x128xf32>
    %41 = arith.subf %40, %39 : vector<8x128xf32>
    %42 = math.exp %41 : vector<8x128xf32>
    %43 = math.log1p %42 : vector<8x128xf32>
    %44 = arith.addf %38, %43 : vector<8x128xf32>
    %c1_i32_22 = arith.constant 1 : i32
    %45 = vector.broadcast %c1_i32_22 : i32 to vector<8x128xi32>
    %46 = arith.cmpi slt, %36, %45 : vector<8x128xi32>
    %c2_i32 = arith.constant 2 : i32
    %47 = vector.broadcast %c2_i32 : i32 to vector<8x128xi32>
    %48 = arith.cmpi sge, %36, %47 : vector<8x128xi32>
    %c3_i32 = arith.constant 3 : i32
    %49 = vector.broadcast %c3_i32 : i32 to vector<8x128xi32>
    %50 = arith.cmpi slt, %36, %49 : vector<8x128xi32>
    %51 = arith.andi %48, %50 : vector<8x128xi1>
    %52 = arith.select %46, %19, %44 : vector<8x128xi1>, vector<8x128xf32>
    %cst_23 = arith.constant 1.000000e+00 : f32
    %cst_24 = arith.constant 0.000000e+00 : f32
    %53 = vector.broadcast %cst_23 : f32 to vector<8x128xf32>
    %54 = vector.broadcast %cst_24 : f32 to vector<8x128xf32>
    %55 = arith.select %51, %53, %54 : vector<8x128xi1>, vector<8x128xf32>
    %56 = arith.addf %52, %55 : vector<8x128xf32>
    %c0_25 = arith.constant 0 : index
    %c0_26 = arith.constant 0 : index
    %57 = vector.load %arg8[%c0_25, %c0_26] : memref<128x128xf32, #tpu.memory_space<vmem>>, vector<128x128xf32>
    %cst_27 = arith.constant dense<0.000000e+00> : vector<8x128xf32>
    %58 = tpu.matmul %56, %57, %cst_27 {dimension_numbers = #tpu.dot_dimension_numbers<[1], [0], [0], [1], [0, 0, 1, 1], [], []>} : vector<8x128xf32>, vector<128x128xf32>, vector<8x128xf32> -> vector<8x128xf32>
    %c0_28 = arith.constant 0 : index
    %c0_29 = arith.constant 0 : index
    %59 = vector.load %arg9[%c0_28, %c0_29] : memref<8x128xf32, #tpu.memory_space<vmem>>, vector<8x128xf32>
    tpu.vector_store %arg9[%c0_28, %c0_29], %58 {strides = array<i32>} : memref<8x128xf32, #tpu.memory_space<vmem>>, vector<8x128xf32>,
    return
  }
  func.func @transform_0(%arg0: i32) -> (i32, i32) {
    %c0_i32 = arith.constant 0 : i32
    %c0_i32_0 = arith.constant 0 : i32
    return %arg0, %c0_i32 : i32, i32
  }
  func.func @transform_1(%arg0: i32) -> (i32, i32) {
    %c0_i32 = arith.constant 0 : i32
    %c0_i32_0 = arith.constant 0 : i32
    %c0_i32_1 = arith.constant 0 : i32
    return %c0_i32, %c0_i32_0 : i32, i32
  }
  func.func @transform_2(%arg0: i32) -> (i32, i32) {
    %c0_i32 = arith.constant 0 : i32
    %c0_i32_0 = arith.constant 0 : i32
    %c0_i32_1 = arith.constant 0 : i32
    return %c0_i32, %c0_i32_0 : i32, i32
  }
  func.func @transform_3(%arg0: i32) -> (i32, i32) {
    %c0_i32 = arith.constant 0 : i32
    %c0_i32_0 = arith.constant 0 : i32
    %c0_i32_1 = arith.constant 0 : i32
    return %c0_i32, %c0_i32_0 : i32, i32
  }
  func.func @transform_4(%arg0: i32) -> (i32, i32) {
    %c0_i32 = arith.constant 0 : i32
    %c0_i32_0 = arith.constant 0 : i32
    %c0_i32_1 = arith.constant 0 : i32
    return %c0_i32, %c0_i32_0 : i32, i32
  }
  func.func @transform_5(%arg0: i32) -> (i32, i32) {
    %c0_i32 = arith.constant 0 : i32
    %c0_i32_0 = arith.constant 0 : i32
    %c0_i32_1 = arith.constant 0 : i32
    return %c0_i32, %c0_i32_0 : i32, i32
  }
  func.func @transform_6(%arg0: i32) -> (i32, i32) {
    %c0_i32 = arith.constant 0 : i32
    %c0_i32_0 = arith.constant 0 : i32
    %c0_i32_1 = arith.constant 0 : i32
    return %c0_i32, %c0_i32_0 : i32, i32
  }
  func.func @transform_7(%arg0: i32) -> (i32, i32) {
    %c0_i32 = arith.constant 0 : i32
    %c0_i32_0 = arith.constant 0 : i32
    %c0_i32_1 = arith.constant 0 : i32
    return %c0_i32, %c0_i32_0 : i32, i32
  }
  func.func @transform_8(%arg0: i32) -> (i32, i32) {
    %c0_i32 = arith.constant 0 : i32
    %c0_i32_0 = arith.constant 0 : i32
    return %arg0, %c0_i32 : i32, i32
  }
}

</mosaic_0001>

<llo_original>
// kernel: ensemble_forward.1
$region0: #{ensemble_forward.1}
  #allocation0 [shape = 'u32[]', space=smem, size = 0x4, offset = 0x4, fixed_abs, tag = 'smem constant byte address 0x4 - core index']
  #allocation1 [shape = 'u32[144,128]{1,0:T(1,128)}', space=vmem, size = 0x12000, scoped, tag = 'internal scratch']
  %s0 = inlined_call_operand.hbm [shape: f32[8,16], index: 0, kind: input, shape index: {}]
  %s1 = inlined_call_operand.hbm [shape: f32[16,128], index: 1, kind: input, shape index: {}]
  %s2 = inlined_call_operand.vmem [shape: f32[1,128], index: 2, kind: input, shape index: {}]
  %s3 = inlined_call_operand.hbm [shape: f32[128,128], index: 3, kind: input, shape index: {}]
  %s4 = inlined_call_operand.vmem [shape: f32[1,128], index: 4, kind: input, shape index: {}]
  %s5 = inlined_call_operand.hbm [shape: f32[128,128], index: 5, kind: input, shape index: {}]
  %s6 = inlined_call_operand.vmem [shape: f32[1,128], index: 6, kind: input, shape index: {}]
  %s7 = inlined_call_operand.hbm [shape: f32[128,128], index: 7, kind: input, shape index: {}]
  %s8 = inlined_call_operand.vmem [shape: f32[8,128], index: 8, kind: output, shape index: {}]
  %s9 = sld [smem:[#allocation0]]
  $region62: #{ensemble_forward.1} parent=0
    _
  %s11 = ssub.s32 1, %s9
  %s12 = scalar_select 0, %s11, %s9
  $region1: #{ensemble_forward.1} parent=0
    #allocation2 [shape = 'u8[4096]{0}', space=vmem, size = 0x1000, scoped, tag = 'input window, operand 0, single buffered']
    #allocation3 [shape = 's32[1]{0}', space=sflag, size = 0x4, scoped, tag = 'scoped memory for ensemble_forward.1']
    #allocation4 [shape = 'u8[8192]{0}', space=vmem, size = 0x2000, scoped, tag = 'input window, operand 1, single buffered']
    #allocation5 [shape = 's32[1]{0}', space=sflag, size = 0x4, scoped, tag = 'scoped memory for ensemble_forward.1']
    #allocation6 [shape = 'u8[65536]{0}', space=vmem, size = 0x10000, scoped, tag = 'input window, operand 3, single buffered']
    #allocation7 [shape = 'u8[65536]{0}', space=vmem, size = 0x10000, scoped, tag = 'input window, operand 5, single buffered']
    #allocation8 [shape = 's32[1]{0}', space=sflag, size = 0x4, scoped, tag = 'scoped memory for ensemble_forward.1']
    #allocation9 [shape = 'u8[65536]{0}', space=vmem, size = 0x10000, scoped, tag = 'input window, operand 7, single buffered']
    %13 = vsyncpa [#allocation3], 0
    %14 = vsyncpa [#allocation5], 0
    %15 = vsyncpa [#allocation8], 0
    // Predicated region
    $region2: #{ensemble_forward.1} parent=1 // pred_check
      _
    $region3: #{ensemble_forward.1} parent=1 // pred_check_branch
      %17 = sbr.rel (0) target = $region5
    $region4: #{ensemble_forward.1} parent=1 // pred_region
      %s19 = ssub.s32 128, 128
      %20 = vsyncadd [#allocation3], %s19
      %s22 = sshll.u32 [#allocation2], 4
      %s23 = int_to_ptr.vmem [resolvable:$true] %s22
      %25 = dma.hbm_to_vmem [thread:$0]  %s0, 128, %s23, [#allocation3]
    $region5: #{ensemble_forward.1} parent=1 // pred_fallthru
      _
    // Predicated region
    $region6: #{ensemble_forward.1} parent=1 // pred_check
      _
    $region7: #{ensemble_forward.1} parent=1 // pred_check_branch
      %27 = sbr.rel (0) target = $region9
    $region8: #{ensemble_forward.1} parent=1 // pred_region
      %s29 = ssub.s32 256, 256
      %30 = vsyncadd [#allocation5], %s29
      %s31 = sshll.u32 [#allocation4], 4
      %s32 = int_to_ptr.vmem [resolvable:$true] %s31
      %37 = dma.hbm_to_vmem [thread:$0]  %s1, 256, %s32, [#allocation5], 128, 128, 8
    $region9: #{ensemble_forward.1} parent=1 // pred_fallthru
      _
    // Predicated region
    $region10: #{ensemble_forward.1} parent=1 // pred_check
      _
    $region11: #{ensemble_forward.1} parent=1 // pred_check_branch
      %39 = sbr.rel (0) target = $region13
    $region12: #{ensemble_forward.1} parent=1 // pred_region
      _
    $region13: #{ensemble_forward.1} parent=1 // pred_fallthru
      _
    // Predicated region
    $region14: #{ensemble_forward.1} parent=1 // pred_check
      _
    $region15: #{ensemble_forward.1} parent=1 // pred_check_branch
      %41 = sbr.rel (0) target = $region17
    $region16: #{ensemble_forward.1} parent=1 // pred_region
      %s43 = ssub.s32 2048, 2048
      %44 = vsyncadd [#allocation5], %s43
      %s45 = sshll.u32 [#allocation6], 4
      %s46 = int_to_ptr.vmem [resolvable:$true] %s45
      %51 = dma.hbm_to_vmem [thread:$0]  %s3, 2048, %s46, [#allocation5], 128, 128, 8
    $region17: #{ensemble_forward.1} parent=1 // pred_fallthru
      _
    // Predicated region
    $region18: #{ensemble_forward.1} parent=1 // pred_check
      _
    $region19: #{ensemble_forward.1} parent=1 // pred_check_branch
      %53 = sbr.rel (0) target = $region21
    $region20: #{ensemble_forward.1} parent=1 // pred_region
      _
    $region21: #{ensemble_forward.1} parent=1 // pred_fallthru
      _
    // Predicated region
    $region22: #{ensemble_forward.1} parent=1 // pred_check
      _
    $region23: #{ensemble_forward.1} parent=1 // pred_check_branch
      %55 = sbr.rel (0) target = $region25
    $region24: #{ensemble_forward.1} parent=1 // pred_region
      %s57 = ssub.s32 2048, 2048
      %58 = vsyncadd [#allocation8], %s57
      %s59 = sshll.u32 [#allocation7], 4
      %s60 = int_to_ptr.vmem [resolvable:$true] %s59
      %65 = dma.hbm_to_vmem [thread:$0]  %s5, 2048, %s60, [#allocation8], 128, 128, 8
    $region25: #{ensemble_forward.1} parent=1 // pred_fallthru
      _
    // Predicated region
    $region26: #{ensemble_forward.1} parent=1 // pred_check
      _
    $region27: #{ensemble_forward.1} parent=1 // pred_check_branch
      %67 = sbr.rel (0) target = $region29
    $region28: #{ensemble_forward.1} parent=1 // pred_region
      _
    $region29: #{ensemble_forward.1} parent=1 // pred_fallthru
      _
    // Predicated region
    $region30: #{ensemble_forward.1} parent=1 // pred_check
      _
    $region31: #{ensemble_forward.1} parent=1 // pred_check_branch
      %69 = sbr.rel (0) target = $region33
    $region32: #{ensemble_forward.1} parent=1 // pred_region
      %s71 = ssub.s32 2048, 2048
      %72 = vsyncadd [#allocation8], %s71
      %s73 = sshll.u32 [#allocation9], 4
      %s74 = int_to_ptr.vmem [resolvable:$true] %s73
      %79 = dma.hbm_to_vmem [thread:$0]  %s7, 2048, %s74, [#allocation8], 128, 128, 8
    $region33: #{ensemble_forward.1} parent=1 // pred_fallthru
      _
    // Predicated region
    $region34: #{ensemble_forward.1} parent=1 // pred_check
      _
    $region35: #{ensemble_forward.1} parent=1 // pred_check_branch
      %81 = sbr.rel (0) target = $region37
    $region36: #{ensemble_forward.1} parent=1 // pred_region
      %82 = dma.done [#allocation3], 128
    $region37: #{ensemble_forward.1} parent=1 // pred_fallthru
      _
    // Predicated region
    $region38: #{ensemble_forward.1} parent=1 // pred_check
      _
    $region39: #{ensemble_forward.1} parent=1 // pred_check_branch
      %84 = sbr.rel (0) target = $region41
    $region40: #{ensemble_forward.1} parent=1 // pred_region
      %85 = dma.done [#allocation5], 256
    $region41: #{ensemble_forward.1} parent=1 // pred_fallthru
      _
    // Predicated region
    $region42: #{ensemble_forward.1} parent=1 // pred_check
      _
    $region43: #{ensemble_forward.1} parent=1 // pred_check_branch
      %87 = sbr.rel (0) target = $region45
    $region44: #{ensemble_forward.1} parent=1 // pred_region
      %88 = dma.done [#allocation5], 2048
    $region45: #{ensemble_forward.1} parent=1 // pred_fallthru
      _
    // Predicated region
    $region46: #{ensemble_forward.1} parent=1 // pred_check
      _
    $region47: #{ensemble_forward.1} parent=1 // pred_check_branch
      %90 = sbr.rel (0) target = $region49
    $region48: #{ensemble_forward.1} parent=1 // pred_region
      %91 = dma.done [#allocation8], 2048
    $region49: #{ensemble_forward.1} parent=1 // pred_fallthru
      _
    // Predicated region
    $region50: #{ensemble_forward.1} parent=1 // pred_check
      _
    $region51: #{ensemble_forward.1} parent=1 // pred_check_branch
      %93 = sbr.rel (0) target = $region53
    $region52: #{ensemble_forward.1} parent=1 // pred_region
      %94 = dma.done [#allocation8], 2048
    $region53: #{ensemble_forward.1} parent=1 // pred_fallthru
      _
    %v95 = vld [vmem:[#allocation2] sm:$0xff]
    %v96 = vld [vmem:[#allocation4] sm:$0xff]
    %v97 = vld [vmem:[#allocation4 + $0x8] sm:$0xff]
    %v98 = vld [vmem:[%s2] sm:$0x1]
    %v100 = vlaneseq
    %v101 = vshrl.u32 %v100, 7
    %v102 = vsub.s32 0, %v101
    %v103 = vrot.slane %v98, %v102
    %vm105 = vcmask 130048
    %v107 = vsel %vm105, %v95, 0
    %109 = vmatprep.subr.mxu0 0.0
    %110 = vmatpush1.msra.mxu0 0.0
    %111 = vmatprep.subr.mxu0 0.0
    %112 = vmatpush1.msra.mxu0 0.0
    %113 = vmatprep.subr.mxu0 0.0
    %114 = vmatpush1.msra.mxu0 0.0
    %115 = vmatprep.subr.mxu0 0.0
    %116 = vmatpush1.msra.mxu0 0.0
    %117 = vmatprep.subr.mxu0 0.0
    %118 = vmatpush1.msra.mxu0 0.0
    %119 = vmatprep.subr.mxu0 0.0
    %120 = vmatpush1.msra.mxu0 0.0
    %121 = vmatprep.subr.mxu0 0.0
    %122 = vmatpush1.msra.mxu0 0.0
    %123 = vmatprep.subr.mxu0 0.0
    %124 = vmatpush1.msra.mxu0 0.0
    %125 = vmatprep.subr.mxu0 0.0
    %126 = vmatpush1.msra.mxu0 0.0
    %127 = vmatprep.subr.mxu0 0.0
    %128 = vmatpush1.msra.mxu0 0.0
    %129 = vmatprep.subr.mxu0 0.0
    %130 = vmatpush1.msra.mxu0 0.0
    %131 = vmatprep.subr.mxu0 0.0
    %132 = vmatpush1.msra.mxu0 0.0
    %133 = vmatprep.subr.mxu0 0.0
    %134 = vmatpush1.msra.mxu0 0.0
    %135 = vmatprep.subr.mxu0 0.0
    %136 = vmatpush1.msra.mxu0 0.0
    %137 = vmatprep.subr.mxu0 0.0
    %138 = vmatpush1.msra.mxu0 %v97
    %139 = vmatprep.subr.mxu0 0.0
    %140 = vmatpush1.msra.mxu0 %v96
    %141 = vmatprep.subr.mxu0 0.0
    %142 = vmatpush2.msra.mxu0 0.0
    %143 = vmatprep.subr.mxu0 0.0
    %144 = vmatpush2.msra.mxu0 0.0
    %145 = vmatprep.subr.mxu0 0.0
    %146 = vmatpush2.msra.mxu0 0.0
    %147 = vmatprep.subr.mxu0 0.0
    %148 = vmatpush2.msra.mxu0 0.0
    %149 = vmatprep.subr.mxu0 0.0
    %150 = vmatpush2.msra.mxu0 0.0
    %151 = vmatprep.subr.mxu0 0.0
    %152 = vmatpush2.msra.mxu0 0.0
    %153 = vmatprep.subr.mxu0 0.0
    %154 = vmatpush2.msra.mxu0 0.0
    %155 = vmatprep.subr.mxu0 0.0
    %156 = vmatpush2.msra.mxu0 0.0
    %157 = vmatprep.subr.mxu0 0.0
    %158 = vmatpush2.msra.mxu0 0.0
    %159 = vmatprep.subr.mxu0 0.0
    %160 = vmatpush2.msra.mxu0 0.0
    %161 = vmatprep.subr.mxu0 0.0
    %162 = vmatpush2.msra.mxu0 0.0
    %163 = vmatprep.subr.mxu0 0.0
    %164 = vmatpush2.msra.mxu0 0.0
    %165 = vmatprep.subr.mxu0 0.0
    %166 = vmatpush2.msra.mxu0 0.0
    %167 = vmatprep.subr.mxu0 0.0
    %168 = vmatpush2.msra.mxu0 0.0
    %169 = vmatprep.subr.mxu0 0.0
    %170 = vmatpush2.msra.mxu0 0.0
    %171 = vmatprep.subr.mxu0 0.0
    %172 = vmatpush2.msra.mxu0 0.0
    %173 = vmatprep.mubr.f32.mxu0 0.0
    %174 = vmatmul.mubr.f32.gmra.mxu0 %v107
    %v175 = vpop.f32.mrf.mxu0
    %v176 = vadd.f32 %v103, %v175
    %v177 = vpop.f32.mrf.mxu0
    %178 = vdwg.mxu0
    %v179 = vmax.f32 %v176, 0.0
    %v180 = vld [vmem:[#allocation6] sm:$0xff]
    %v181 = vld [vmem:[#allocation6 + $0x8] sm:$0xff]
    %v182 = vld [vmem:[#allocation6 + $0x10] sm:$0xff]
    %v183 = vld [vmem:[#allocation6 + $0x18] sm:$0xff]
    %v184 = vld [vmem:[#allocation6 + $0x20] sm:$0xff]
    %v185 = vld [vmem:[#allocation6 + $0x28] sm:$0xff]
    %v186 = vld [vmem:[#allocation6 + $0x30] sm:$0xff]
    %v187 = vld [vmem:[#allocation6 + $0x38] sm:$0xff]
    %v188 = vld [vmem:[#allocation6 + $0x40] sm:$0xff]
    %v189 = vld [vmem:[#allocation6 + $0x48] sm:$0xff]
    %v190 = vld [vmem:[#allocation6 + $0x50] sm:$0xff]
    %v191 = vld [vmem:[#allocation6 + $0x58] sm:$0xff]
    %v192 = vld [vmem:[#allocation6 + $0x60] sm:$0xff]
    %v193 = vld [vmem:[#allocation6 + $0x68] sm:$0xff]
    %v194 = vld [vmem:[#allocation6 + $0x70] sm:$0xff]
    %v195 = vld [vmem:[#allocation6 + $0x78] sm:$0xff]
    %v196 = vld [vmem:[%s4] sm:$0x1]
    %v198 = vlaneseq
    %v199 = vshrl.u32 %v198, 7
    %v200 = vsub.s32 0, %v199
    %v201 = vrot.slane %v196, %v200
    %203 = vmatprep.subr.mxu0 0.0
    %204 = vmatpush1.msra.mxu0 %v195
    %205 = vmatprep.subr.mxu0 0.0
    %206 = vmatpush1.msra.mxu0 %v194
    %207 = vmatprep.subr.mxu0 0.0
    %208 = vmatpush1.msra.mxu0 %v193
    %209 = vmatprep.subr.mxu0 0.0
    %210 = vmatpush1.msra.mxu0 %v192
    %211 = vmatprep.subr.mxu0 0.0
    %212 = vmatpush1.msra.mxu0 %v191
    %213 = vmatprep.subr.mxu0 0.0
    %214 = vmatpush1.msra.mxu0 %v190
    %215 = vmatprep.subr.mxu0 0.0
    %216 = vmatpush1.msra.mxu0 %v189
    %217 = vmatprep.subr.mxu0 0.0
    %218 = vmatpush1.msra.mxu0 %v188
    %219 = vmatprep.subr.mxu0 0.0
    %220 = vmatpush1.msra.mxu0 %v187
    %221 = vmatprep.subr.mxu0 0.0
    %222 = vmatpush1.msra.mxu0 %v186
    %223 = vmatprep.subr.mxu0 0.0
    %224 = vmatpush1.msra.mxu0 %v185
    %225 = vmatprep.subr.mxu0 0.0
    %226 = vmatpush1.msra.mxu0 %v184
    %227 = vmatprep.subr.mxu0 0.0
    %228 = vmatpush1.msra.mxu0 %v183
    %229 = vmatprep.subr.mxu0 0.0
    %230 = vmatpush1.msra.mxu0 %v182
    %231 = vmatprep.subr.mxu0 0.0
    %232 = vmatpush1.msra.mxu0 %v181
    %233 = vmatprep.subr.mxu0 0.0
    %234 = vmatpush1.msra.mxu0 %v180
    %235 = vmatprep.subr.mxu0 0.0
    %236 = vmatpush2.msra.mxu0 0.0
    %237 = vmatprep.subr.mxu0 0.0
    %238 = vmatpush2.msra.mxu0 0.0
    %239 = vmatprep.subr.mxu0 0.0
    %240 = vmatpush2.msra.mxu0 0.0
    %241 = vmatprep.subr.mxu0 0.0
    %242 = vmatpush2.msra.mxu0 0.0
    %243 = vmatprep.subr.mxu0 0.0
    %244 = vmatpush2.msra.mxu0 0.0
    %245 = vmatprep.subr.mxu0 0.0
    %246 = vmatpush2.msra.mxu0 0.0
    %247 = vmatprep.subr.mxu0 0.0
    %248 = vmatpush2.msra.mxu0 0.0
    %249 = vmatprep.subr.mxu0 0.0
    %250 = vmatpush2.msra.mxu0 0.0
    %251 = vmatprep.subr.mxu0 0.0
    %252 = vmatpush2.msra.mxu0 0.0
    %253 = vmatprep.subr.mxu0 0.0
    %254 = vmatpush2.msra.mxu0 0.0
    %255 = vmatprep.subr.mxu0 0.0
    %256 = vmatpush2.msra.mxu0 0.0
    %257 = vmatprep.subr.mxu0 0.0
    %258 = vmatpush2.msra.mxu0 0.0
    %259 = vmatprep.subr.mxu0 0.0
    %260 = vmatpush2.msra.mxu0 0.0
    %261 = vmatprep.subr.mxu0 0.0
    %262 = vmatpush2.msra.mxu0 0.0
    %263 = vmatprep.subr.mxu0 0.0
    %264 = vmatpush2.msra.mxu0 0.0
    %265 = vmatprep.subr.mxu0 0.0
    %266 = vmatpush2.msra.mxu0 0.0
    %267 = vmatprep.mubr.f32.mxu0 0.0
    %268 = vmatmul.mubr.f32.gmra.mxu0 %v179
    %v269 = vpop.f32.mrf.mxu0
    %v270 = vadd.f32 %v201, %v269
    %v271 = vpop.f32.mrf.mxu0
    %272 = vdwg.mxu0
    %v273 = vmax.f32 %v270, 0.0
    %v274 = vld [vmem:[#allocation7] sm:$0xff]
    %v275 = vld [vmem:[#allocation7 + $0x8] sm:$0xff]
    %v276 = vld [vmem:[#allocation7 + $0x10] sm:$0xff]
    %v277 = vld [vmem:[#allocation7 + $0x18] sm:$0xff]
    %v278 = vld [vmem:[#allocation7 + $0x20] sm:$0xff]
    %v279 = vld [vmem:[#allocation7 + $0x28] sm:$0xff]
    %v280 = vld [vmem:[#allocation7 + $0x30] sm:$0xff]
    %v281 = vld [vmem:[#allocation7 + $0x38] sm:$0xff]
    %v282 = vld [vmem:[#allocation7 + $0x40] sm:$0xff]
    %v283 = vld [vmem:[#allocation7 + $0x48] sm:$0xff]
    %v284 = vld [vmem:[#allocation7 + $0x50] sm:$0xff]
    %v285 = vld [vmem:[#allocation7 + $0x58] sm:$0xff]
    %v286 = vld [vmem:[#allocation7 + $0x60] sm:$0xff]
    %v287 = vld [vmem:[#allocation7 + $0x68] sm:$0xff]
    %v288 = vld [vmem:[#allocation7 + $0x70] sm:$0xff]
    %v289 = vld [vmem:[#allocation7 + $0x78] sm:$0xff]
    %v290 = vld [vmem:[%s6] sm:$0x1]
    %v292 = vlaneseq
    %v293 = vshrl.u32 %v292, 7
    %v294 = vsub.s32 0, %v293
    %v295 = vrot.slane %v290, %v294
    %297 = vmatprep.subr.mxu0 0.0
    %298 = vmatpush1.msra.mxu0 %v289
    %299 = vmatprep.subr.mxu0 0.0
    %300 = vmatpush1.msra.mxu0 %v288
    %301 = vmatprep.subr.mxu0 0.0
    %302 = vmatpush1.msra.mxu0 %v287
    %303 = vmatprep.subr.mxu0 0.0
    %304 = vmatpush1.msra.mxu0 %v286
    %305 = vmatprep.subr.mxu0 0.0
    %306 = vmatpush1.msra.mxu0 %v285
    %307 = vmatprep.subr.mxu0 0.0
    %308 = vmatpush1.msra.mxu0 %v284
    %309 = vmatprep.subr.mxu0 0.0
    %310 = vmatpush1.msra.mxu0 %v283
    %311 = vmatprep.subr.mxu0 0.0
    %312 = vmatpush1.msra.mxu0 %v282
    %313 = vmatprep.subr.mxu0 0.0
    %314 = vmatpush1.msra.mxu0 %v281
    %315 = vmatprep.subr.mxu0 0.0
    %316 = vmatpush1.msra.mxu0 %v280
    %317 = vmatprep.subr.mxu0 0.0
    %318 = vmatpush1.msra.mxu0 %v279
    %319 = vmatprep.subr.mxu0 0.0
    %320 = vmatpush1.msra.mxu0 %v278
    %321 = vmatprep.subr.mxu0 0.0
    %322 = vmatpush1.msra.mxu0 %v277
    %323 = vmatprep.subr.mxu0 0.0
    %324 = vmatpush1.msra.mxu0 %v276
    %325 = vmatprep.subr.mxu0 0.0
    %326 = vmatpush1.msra.mxu0 %v275
    %327 = vmatprep.subr.mxu0 0.0
    %328 = vmatpush1.msra.mxu0 %v274
    %329 = vmatprep.subr.mxu0 0.0
    %330 = vmatpush2.msra.mxu0 0.0
    %331 = vmatprep.subr.mxu0 0.0
    %332 = vmatpush2.msra.mxu0 0.0
    %333 = vmatprep.subr.mxu0 0.0
    %334 = vmatpush2.msra.mxu0 0.0
    %335 = vmatprep.subr.mxu0 0.0
    %336 = vmatpush2.msra.mxu0 0.0
    %337 = vmatprep.subr.mxu0 0.0
    %338 = vmatpush2.msra.mxu0 0.0
    %339 = vmatprep.subr.mxu0 0.0
    %340 = vmatpush2.msra.mxu0 0.0
    %341 = vmatprep.subr.mxu0 0.0
    %342 = vmatpush2.msra.mxu0 0.0
    %343 = vmatprep.subr.mxu0 0.0
    %344 = vmatpush2.msra.mxu0 0.0
    %345 = vmatprep.subr.mxu0 0.0
    %346 = vmatpush2.msra.mxu0 0.0
    %347 = vmatprep.subr.mxu0 0.0
    %348 = vmatpush2.msra.mxu0 0.0
    %349 = vmatprep.subr.mxu0 0.0
    %350 = vmatpush2.msra.mxu0 0.0
    %351 = vmatprep.subr.mxu0 0.0
    %352 = vmatpush2.msra.mxu0 0.0
    %353 = vmatprep.subr.mxu0 0.0
    %354 = vmatpush2.msra.mxu0 0.0
    %355 = vmatprep.subr.mxu0 0.0
    %356 = vmatpush2.msra.mxu0 0.0
    %357 = vmatprep.subr.mxu0 0.0
    %358 = vmatpush2.msra.mxu0 0.0
    %359 = vmatprep.subr.mxu0 0.0
    %360 = vmatpush2.msra.mxu0 0.0
    %361 = vmatprep.mubr.f32.mxu0 0.0
    %362 = vmatmul.mubr.f32.gmra.mxu0 %v273
    %v363 = vpop.f32.mrf.mxu0
    %v364 = vadd.f32 %v295, %v363
    %v365 = vpop.f32.mrf.mxu0
    %366 = vdwg.mxu0
    %v367 = vlaneseq
    %v368 = vand.u32 %v367, 127
    %vm369 = vcmp.lt.s32.totalorder %v368, 0
    %v370 = vsub.s32 0, %v368
    %v371 = vsel %vm369, %v370, %v368
    %v372 = vshrl.u32 %v371, 2
    %v373 = vand.u32 %v371, 3
    %v374 = vsub.s32 0, %v373
    %v375 = vsel %vm369, %v374, %v373
    %vm376 = vcmp.ne.s32.totalorder %v375, 0
    %vm377 = vcmp.lt.s32.totalorder %v375, 0
    %vm378 = vmand %vm377, %vm376
    %v379 = vadd.s32 %v375, 4
    %v380 = vsel %vm378, %v379, %v375
    %v381 = vmax.f32 %v364, 0.0
    %v382 = vand.u32 2147483647, %v364
    %v383 = vsub.f32 0.0, %v382
    %v384 = vmul.f32 %v383, 1.442695
    %v385 = vpow.pop %v384
    %v386 = vadd.f32 %v385, 1.0
    %v387 = vlog2.pop %v386
    %v388 = vmul.f32 %v387, 0.6931472
    %v389 = vmul.f32 -0.5, %v385
    %v390 = vadd.f32 %v389, 1.0
    %v391 = vmul.f32 %v390, %v385
    %v392 = vand.u32 2147483647, %v385
    %vm393 = vcmp.lt.f32.partialorder %v392, 0.0004427343
    %v394 = vsel %vm393, %v391, %v388
    %v395 = vadd.f32 %v381, %v394
    %vm396 = vcmp.lt.s32.totalorder %v380, 1
    %vm397 = vcmp.ge.s32.totalorder %v380, 2
    %vm398 = vcmp.lt.s32.totalorder %v380, 3
    %vm399 = vmand %vm397, %vm398
    %v400 = vsel %vm396, %v364, %v395
    %v401 = vsel %vm399, 1.0, 0.0
    %v402 = vadd.f32 %v400, %v401
    %v403 = vld [vmem:[#allocation9] sm:$0xff]
    %v404 = vld [vmem:[#allocation9 + $0x8] sm:$0xff]
    %v405 = vld [vmem:[#allocation9 + $0x10] sm:$0xff]
    %v406 = vld [vmem:[#allocation9 + $0x18] sm:$0xff]
    %v407 = vld [vmem:[#allocation9 + $0x20] sm:$0xff]
    %v408 = vld [vmem:[#allocation9 + $0x28] sm:$0xff]
    %v409 = vld [vmem:[#allocation9 + $0x30] sm:$0xff]
    %v410 = vld [vmem:[#allocation9 + $0x38] sm:$0xff]
    %v411 = vld [vmem:[#allocation9 + $0x40] sm:$0xff]
    %v412 = vld [vmem:[#allocation9 + $0x48] sm:$0xff]
    %v413 = vld [vmem:[#allocation9 + $0x50] sm:$0xff]
    %v414 = vld [vmem:[#allocation9 + $0x58] sm:$0xff]
    %v415 = vld [vmem:[#allocation9 + $0x60] sm:$0xff]
    %v416 = vld [vmem:[#allocation9 + $0x68] sm:$0xff]
    %v417 = vld [vmem:[#allocation9 + $0x70] sm:$0xff]
    %v418 = vld [vmem:[#allocation9 + $0x78] sm:$0xff]
    %419 = vmatprep.subr.mxu0 0.0
    %420 = vmatpush1.msra.mxu0 %v418
    %421 = vmatprep.subr.mxu0 0.0
    %422 = vmatpush1.msra.mxu0 %v417
    %423 = vmatprep.subr.mxu0 0.0
    %424 = vmatpush1.msra.mxu0 %v416
    %425 = vmatprep.subr.mxu0 0.0
    %426 = vmatpush1.msra.mxu0 %v415
    %427 = vmatprep.subr.mxu0 0.0
    %428 = vmatpush1.msra.mxu0 %v414
    %429 = vmatprep.subr.mxu0 0.0
    %430 = vmatpush1.msra.mxu0 %v413
    %431 = vmatprep.subr.mxu0 0.0
    %432 = vmatpush1.msra.mxu0 %v412
    %433 = vmatprep.subr.mxu0 0.0
    %434 = vmatpush1.msra.mxu0 %v411
    %435 = vmatprep.subr.mxu0 0.0
    %436 = vmatpush1.msra.mxu0 %v410
    %437 = vmatprep.subr.mxu0 0.0
    %438 = vmatpush1.msra.mxu0 %v409
    %439 = vmatprep.subr.mxu0 0.0
    %440 = vmatpush1.msra.mxu0 %v408
    %441 = vmatprep.subr.mxu0 0.0
    %442 = vmatpush1.msra.mxu0 %v407
    %443 = vmatprep.subr.mxu0 0.0
    %444 = vmatpush1.msra.mxu0 %v406
    %445 = vmatprep.subr.mxu0 0.0
    %446 = vmatpush1.msra.mxu0 %v405
    %447 = vmatprep.subr.mxu0 0.0
    %448 = vmatpush1.msra.mxu0 %v404
    %449 = vmatprep.subr.mxu0 0.0
    %450 = vmatpush1.msra.mxu0 %v403
    %451 = vmatprep.subr.mxu0 0.0
    %452 = vmatpush2.msra.mxu0 0.0
    %453 = vmatprep.subr.mxu0 0.0
    %454 = vmatpush2.msra.mxu0 0.0
    %455 = vmatprep.subr.mxu0 0.0
    %456 = vmatpush2.msra.mxu0 0.0
    %457 = vmatprep.subr.mxu0 0.0
    %458 = vmatpush2.msra.mxu0 0.0
    %459 = vmatprep.subr.mxu0 0.0
    %460 = vmatpush2.msra.mxu0 0.0
    %461 = vmatprep.subr.mxu0 0.0
    %462 = vmatpush2.msra.mxu0 0.0
    %463 = vmatprep.subr.mxu0 0.0
    %464 = vmatpush2.msra.mxu0 0.0
    %465 = vmatprep.subr.mxu0 0.0
    %466 = vmatpush2.msra.mxu0 0.0
    %467 = vmatprep.subr.mxu0 0.0
    %468 = vmatpush2.msra.mxu0 0.0
    %469 = vmatprep.subr.mxu0 0.0
    %470 = vmatpush2.msra.mxu0 0.0
    %471 = vmatprep.subr.mxu0 0.0
    %472 = vmatpush2.msra.mxu0 0.0
    %473 = vmatprep.subr.mxu0 0.0
    %474 = vmatpush2.msra.mxu0 0.0
    %475 = vmatprep.subr.mxu0 0.0
    %476 = vmatpush2.msra.mxu0 0.0
    %477 = vmatprep.subr.mxu0 0.0
    %478 = vmatpush2.msra.mxu0 0.0
    %479 = vmatprep.subr.mxu0 0.0
    %480 = vmatpush2.msra.mxu0 0.0
    %481 = vmatprep.subr.mxu0 0.0
    %482 = vmatpush2.msra.mxu0 0.0
    %483 = vmatprep.mubr.f32.mxu0 0.0
    %484 = vmatmul.mubr.f32.gmra.mxu0 %v402
    %v485 = vpop.f32.mrf.mxu0
    %v486 = vadd.f32 0.0, %v485
    %v487 = vpop.f32.mrf.mxu0
    %488 = vdwg.mxu0
    %489 = vst [vmem:[%s8] sm:$0xff] %v486
    // Predicated region
    $region54: #{ensemble_forward.1} parent=1 // pred_check
      _
    $region55: #{ensemble_forward.1} parent=1 // pred_check_branch
      %491 = sbr.rel (0) target = $region57
    $region56: #{ensemble_forward.1} parent=1 // pred_region
      _
    $region57: #{ensemble_forward.1} parent=1 // pred_fallthru
      _
    // Predicated region
    $region58: #{ensemble_forward.1} parent=1 // pred_check
      _
    $region59: #{ensemble_forward.1} parent=1 // pred_check_branch
      %493 = sbr.rel (0) target = $region61
    $region60: #{ensemble_forward.1} parent=1 // pred_region
      _
    $region61: #{ensemble_forward.1} parent=1 // pred_fallthru
      _
    %494 = vsyncpa [#allocation3], 1
    %495 = vsyncpa [#allocation5], 1
    %496 = vsyncpa [#allocation8], 1

</llo_original>
